<compile_context>
chip_gen: v5e
topology: v5e:2x2
jax: 0.10.0
libtpu: 0.0.40
codegen_flags: <defaults>
</compile_context>

<pallas_src>
import functools
import math

import jax
import jax.numpy as jnp
from jax.experimental import pallas as pl
from jax.experimental.pallas import tpu as pltpu


def _round_up(x, m):
    return ((x + m - 1) // m) * m


# ----------------------------- linear: x @ W (+ b) -----------------------------

def _linear_bias_kernel(x_ref, w_ref, b_ref, o_ref):
    acc = jnp.dot(x_ref[...], w_ref[...], preferred_element_type=jnp.float32)
    acc = acc + b_ref[...].astype(jnp.float32)
    o_ref[...] = acc.astype(o_ref.dtype)


def _linear_kernel(x_ref, w_ref, o_ref):
    acc = jnp.dot(x_ref[...], w_ref[...], preferred_element_type=jnp.float32)
    o_ref[...] = acc.astype(o_ref.dtype)


def _linear(x2, w, b=None, *, tile_m=256):
    """x2: (M, K), w: (K, N) [(in, out) layout == PyTorch weight.T], b: (N,) or None."""
    M, K = x2.shape
    N = w.shape[1]
    tm = min(tile_m, _round_up(M, 8))
    Mp = _round_up(M, tm)
    if Mp != M:
        x2 = jnp.pad(x2, ((0, Mp - M), (0, 0)))

    in_specs = [
        pl.BlockSpec((tm, K), lambda i: (i, 0)),
        pl.BlockSpec((K, N), lambda i: (0, 0)),
    ]
    args = [x2, w]
    if b is not None:
        in_specs.append(pl.BlockSpec((1, N), lambda i: (0, 0)))
        args.append(b.reshape(1, N))
        kernel = _linear_bias_kernel
    else:
        kernel = _linear_kernel

    out = pl.pallas_call(
        kernel,
        out_shape=jax.ShapeDtypeStruct((Mp, N), x2.dtype),
        grid_spec=pltpu.PrefetchScalarGridSpec(
            num_scalar_prefetch=0,
            grid=(Mp // tm,),
            in_specs=in_specs,
            out_specs=pl.BlockSpec((tm, N), lambda i: (i, 0)),
        ),
        compiler_params=pltpu.CompilerParams(
            dimension_semantics=("parallel",),
            vmem_limit_bytes=48 * 1024 * 1024,
        ),
    )(*args)
    if Mp != M:
        out = out[:M]
    return out


# --------------------- causal flash attention (online softmax) ---------------------

def _flash_attn_kernel(q_ref, k_ref, v_ref, o_ref, m_sc, l_sc, acc_sc, *,
                       sm_scale, block_q, block_k):
    qi = pl.program_id(1)
    ki = pl.program_id(2)

    @pl.when(ki == 0)
    def _():
        m_sc[...] = jnp.full_like(m_sc, -jnp.inf)
        l_sc[...] = jnp.zeros_like(l_sc)
        acc_sc[...] = jnp.zeros_like(acc_sc)

    def tile_update(apply_mask):
        def body():
            q = q_ref[0]                                   # (block_q, hd)
            k = k_ref[0]                                   # (block_k, hd)
            s = jax.lax.dot_general(
                q, k, (((1,), (1,)), ((), ())),
                preferred_element_type=jnp.float32) * sm_scale
            if apply_mask:
                q_start = qi * block_q
                k_start = ki * block_k
                row = q_start + jax.lax.broadcasted_iota(
                    jnp.int32, (block_q, block_k), 0)
                col = k_start + jax.lax.broadcasted_iota(
                    jnp.int32, (block_q, block_k), 1)
                s = jnp.where(row >= col, s, -jnp.inf)
            m_prev = m_sc[...]
            m_new = jnp.maximum(m_prev, jnp.max(s, axis=-1, keepdims=True))
            alpha = jnp.exp(m_prev - m_new)
            p = jnp.exp(s - m_new)
            l_sc[...] = alpha * l_sc[...] + jnp.sum(p, axis=-1, keepdims=True)
            acc_sc[...] = alpha * acc_sc[...] + jnp.dot(
                p.astype(v_ref.dtype), v_ref[0],
                preferred_element_type=jnp.float32)
            m_sc[...] = m_new
        return body

    # ki < qi : tile entirely below the diagonal -> no mask needed.
    pl.when(ki < qi)(tile_update(apply_mask=False))
    # ki == qi: diagonal tile -> apply causal mask.
    pl.when(ki == qi)(tile_update(apply_mask=True))
    # ki > qi : tile entirely above the diagonal -> skipped (K/V DMAs elided by
    # the clamped index_map in the wrapper below).

    @pl.when(ki == pl.num_programs(2) - 1)
    def _():
        o_ref[0] = (acc_sc[...] *
                    pl.reciprocal(l_sc[...], approx=True)).astype(o_ref.dtype)


def _causal_attention(q, k, v, *, block_q=128, block_k=128):
    """q, k, v: (batch*heads, T, head_dim) -> (batch*heads, T, head_dim)."""
    BH, T, hd = q.shape
    sm_scale = 1.0 / math.sqrt(hd)
    blk = min(max(block_q, block_k), _round_up(T, 8))
    Tp = _round_up(T, blk)
    if Tp != T:
        pad = ((0, 0), (0, Tp - T), (0, 0))
        # Padded key columns are removed by the causal mask for all real rows;
        # padded query rows are sliced off after the kernel.
        q = jnp.pad(q, pad)
        k = jnp.pad(k, pad)
        v = jnp.pad(v, pad)

    kernel = functools.partial(
        _flash_attn_kernel, sm_scale=sm_scale, block_q=blk, block_k=blk)

    # Clamp the kv block index for K/V to the current q tile: blocks above the
    # diagonal are never computed, and keeping the index constant there lets
    # Pallas skip the (useless) HBM->VMEM DMAs for those grid steps.
    kv_map = lambda b, i, j: (b, jnp.minimum(i, j), 0)

    out = pl.pallas_call(
        kernel,
        out_shape=jax.ShapeDtypeStruct((BH, Tp, hd), q.dtype),
        grid_spec=pltpu.PrefetchScalarGridSpec(
            num_scalar_prefetch=0,
            grid=(BH, Tp // blk, Tp // blk),
            in_specs=[
                pl.BlockSpec((1, blk, hd), lambda b, i, j: (b, i, 0)),
                pl.BlockSpec((1, blk, hd), kv_map),
                pl.BlockSpec((1, blk, hd), kv_map),
            ],
            out_specs=pl.BlockSpec((1, blk, hd), lambda b, i, j: (b, i, 0)),
            scratch_shapes=[
                pltpu.VMEM((blk, 1), jnp.float32),   # running max
                pltpu.VMEM((blk, 1), jnp.float32),   # running denom
                pltpu.VMEM((blk, hd), jnp.float32),  # output accumulator
            ],
        ),
        compiler_params=pltpu.CompilerParams(
            dimension_semantics=("parallel", "parallel", "arbitrary"),
            vmem_limit_bytes=48 * 1024 * 1024,
        ),
    )(q, k, v)
    if Tp != T:
        out = out[:, :T, :]
    return out


# ------------------------------- full module forward -------------------------------

@functools.partial(jax.jit, static_argnames=("n_head", "block_q", "block_k", "tile_m"))
def causal_self_attention(x, w_attn, b_attn, w_proj, b_proj, n_head,
                          *, block_q=128, block_k=128, tile_m=256):
    B, T, C = x.shape
    assert C % n_head == 0
    hd = C // n_head

    qkv = _linear(x.reshape(B * T, C), w_attn, b_attn, tile_m=tile_m)  # (B*T, 3C)
    qkv = qkv.reshape(B, T, 3, n_head, hd).transpose(2, 0, 3, 1, 4)    # (3, B, H, T, hd)
    q = qkv[0].reshape(B * n_head, T, hd)
    k = qkv[1].reshape(B * n_head, T, hd)
    v = qkv[2].reshape(B * n_head, T, hd)

    y = _causal_attention(q, k, v, block_q=block_q, block_k=block_k)   # (B*H, T, hd)
    y = y.reshape(B, n_head, T, hd).transpose(0, 2, 1, 3).reshape(B * T, C)

    out = _linear(y, w_proj, b_proj, tile_m=tile_m)
    return out.reshape(B, T, C)


# ----------------------------------- reference -----------------------------------

def _reference(x, w_attn, b_attn, w_proj, b_proj, n_head):
    B, T, C = x.shape
    hd = C // n_head
    hp = jax.lax.Precision.HIGHEST
    qkv = jnp.dot(x, w_attn, precision=hp)
    if b_attn is not None:
        qkv = qkv + b_attn
    q, k, v = jnp.split(qkv, 3, axis=-1)
    q = q.reshape(B, T, n_head, hd).transpose(0, 2, 1, 3)
    k = k.reshape(B, T, n_head, hd).transpose(0, 2, 1, 3)
    v = v.reshape(B, T, n_head, hd).transpose(0, 2, 1, 3)
    att = jnp.einsum("bhqd,bhkd->bhqk", q, k, precision=hp) / math.sqrt(hd)
    mask = jnp.tril(jnp.ones((T, T), dtype=bool))
    att = jnp.where(mask[None, None], att, -jnp.inf)
    att = jax.nn.softmax(att, axis=-1)
    y = jnp.einsum("bhqk,bhkd->bhqd", att, v, precision=hp)
    y = y.transpose(0, 2, 1, 3).reshape(B, T, C)
    out = jnp.dot(y, w_proj, precision=hp)
    if b_proj is not None:
        out = out + b_proj
    return out


if __name__ == "__main__":
    key = jax.random.PRNGKey(0)
    B, T, C, n_head = 2, 8, 32, 4
    k1, k2, k3, k4, k5 = jax.random.split(key, 5)
    scale = 1.0 / math.sqrt(C)

    x = jax.random.normal(k1, (B, T, C), jnp.float32)
    # Weights stored in (in_features, out_features) layout (== PyTorch Linear weight.T).
    w_attn = scale * jax.random.normal(k2, (C, 3 * C), jnp.float32)
    b_attn = 0.1 * jax.random.normal(k3, (3 * C,), jnp.float32)
    w_proj = scale * jax.random.normal(k4, (C, C), jnp.float32)
    b_proj = 0.1 * jax.random.normal(k5, (C,), jnp.float32)

    out = causal_self_attention(x, w_attn, b_attn, w_proj, b_proj, n_head=n_head)
    jax.block_until_ready(out)
    ref = _reference(x, w_attn, b_attn, w_proj, b_proj, n_head)
    assert out.shape == (B, T, C) and out.dtype == x.dtype
    err = float(jnp.max(jnp.abs(out - ref)))
    assert err < 2e-2, f"mismatch vs reference: {err}"

    # bias=False path (config.bias = False in the PyTorch module).
    out_nb = causal_self_attention(x, w_attn, None, w_proj, None, n_head=n_head)
    jax.block_until_ready(out_nb)
    ref_nb = _reference(x, w_attn, None, w_proj, None, n_head)
    err_nb = float(jnp.max(jnp.abs(out_nb - ref_nb)))
    assert err_nb < 2e-2, f"mismatch vs reference (no bias): {err_nb}"

    print("KERNEL_OK")
</pallas_src>

<mosaic_0001>
module attributes {stable_mosaic.version = 11 : i64} {
  func.func @_linear_bias_kernel(%arg0: i32, %arg1: memref<16x32xf32, #tpu.memory_space<vmem>>, %arg2: memref<32x96xf32, #tpu.memory_space<vmem>>, %arg3: memref<1x96xf32, #tpu.memory_space<vmem>>, %arg4: memref<16x96xf32, #tpu.memory_space<vmem>>) attributes {dimension_semantics = [#tpu.dimension_semantics<parallel>], iteration_bounds = array<i64: 1>, scalar_prefetch = 0 : i64, scratch_operands = 0 : i64, tpu.core_type = #tpu.core_type<tc>, window_params = [{transform_indices = @transform_0, window_bounds = array<i64: 16, 32>}, {pipeline_mode = #tpu.pipeline_mode<synchronous>, transform_indices = @transform_1, window_bounds = array<i64: 32, 96>}, {pipeline_mode = #tpu.pipeline_mode<synchronous>, transform_indices = @transform_2, window_bounds = array<i64: 1, 96>}, {transform_indices = @transform_3, window_bounds = array<i64: 16, 96>}]} {
    %c0 = arith.constant 0 : index
    %c0_0 = arith.constant 0 : index
    %0 = vector.load %arg1[%c0, %c0_0] : memref<16x32xf32, #tpu.memory_space<vmem>>, vector<16x32xf32>
    %c0_1 = arith.constant 0 : index
    %c0_2 = arith.constant 0 : index
    %1 = vector.load %arg2[%c0_1, %c0_2] : memref<32x96xf32, #tpu.memory_space<vmem>>, vector<32x96xf32>
    %cst = arith.constant dense<0.000000e+00> : vector<16x96xf32>
    %2 = tpu.matmul %0, %1, %cst {dimension_numbers = #tpu.dot_dimension_numbers<[1], [0], [0], [1], [0, 0, 1, 1], [], []>} : vector<16x32xf32>, vector<32x96xf32>, vector<16x96xf32> -> vector<16x96xf32>
    %c0_3 = arith.constant 0 : index
    %c0_4 = arith.constant 0 : index
    %3 = vector.load %arg3[%c0_3, %c0_4] : memref<1x96xf32, #tpu.memory_space<vmem>>, vector<1x96xf32>
    %4 = vector.broadcast %3 : vector<1x96xf32> to vector<16x96xf32>
    %5 = arith.addf %2, %4 : vector<16x96xf32>
    %c0_5 = arith.constant 0 : index
    %c0_6 = arith.constant 0 : index
    %6 = vector.load %arg4[%c0_5, %c0_6] : memref<16x96xf32, #tpu.memory_space<vmem>>, vector<16x96xf32>
    tpu.vector_store %arg4[%c0_5, %c0_6], %5 {strides = array<i32>} : memref<16x96xf32, #tpu.memory_space<vmem>>, vector<16x96xf32>,
    return
  }
  func.func @transform_0(%arg0: i32) -> (i32, i32) {
    %c0_i32 = arith.constant 0 : i32
    %c0_i32_0 = arith.constant 0 : i32
    return %arg0, %c0_i32 : i32, i32
  }
  func.func @transform_1(%arg0: i32) -> (i32, i32) {
    %c0_i32 = arith.constant 0 : i32
    %c0_i32_0 = arith.constant 0 : i32
    %c0_i32_1 = arith.constant 0 : i32
    return %c0_i32, %c0_i32_0 : i32, i32
  }
  func.func @transform_2(%arg0: i32) -> (i32, i32) {
    %c0_i32 = arith.constant 0 : i32
    %c0_i32_0 = arith.constant 0 : i32
    %c0_i32_1 = arith.constant 0 : i32
    return %c0_i32, %c0_i32_0 : i32, i32
  }
  func.func @transform_3(%arg0: i32) -> (i32, i32) {
    %c0_i32 = arith.constant 0 : i32
    %c0_i32_0 = arith.constant 0 : i32
    return %arg0, %c0_i32 : i32, i32
  }
}

module attributes {stable_mosaic.version = 11 : i64} {
  func.func @_flash_attn_kernel(%arg0: i32, %arg1: i32, %arg2: i32, %arg3: memref<1x8x8xf32, #tpu.memory_space<vmem>>, %arg4: memref<1x8x8xf32, #tpu.memory_space<vmem>>, %arg5: memref<1x8x8xf32, #tpu.memory_space<vmem>>, %arg6: memref<1x8x8xf32, #tpu.memory_space<vmem>>, %arg7: memref<8x1xf32, #tpu.memory_space<vmem>>, %arg8: memref<8x1xf32, #tpu.memory_space<vmem>>, %arg9: memref<8x8xf32, #tpu.memory_space<vmem>>) attributes {dimension_semantics = [#tpu.dimension_semantics<parallel>, #tpu.dimension_semantics<parallel>, #tpu.dimension_semantics<arbitrary>], iteration_bounds = array<i64: 8, 1, 1>, scalar_prefetch = 0 : i64, scratch_operands = 3 : i64, tpu.core_type = #tpu.core_type<tc>, window_params = [{transform_indices = @transform_0, window_bounds = array<i64: 1, 8, 8>}, {transform_indices = @transform_1, window_bounds = array<i64: 1, 8, 8>}, {transform_indices = @transform_2, window_bounds = array<i64: 1, 8, 8>}, {transform_indices = @transform_3, window_bounds = array<i64: 1, 8, 8>}]} {
    %c0_i32 = arith.constant 0 : i32
    %0 = arith.cmpi eq, %arg2, %c0_i32 : i32
    %1 = arith.extui %0 : i1 to i32
    %c0_i32_0 = arith.constant 0 : i32
    %2 = arith.cmpi ne, %1, %c0_i32_0 : i32
    scf.if %2 {
      %cst = arith.constant 0xFF800000 : f32
      %12 = vector.broadcast %cst : f32 to vector<8x1xf32>
      %c0 = arith.constant 0 : index
      %c0_5 = arith.constant 0 : index
      %13 = vector.load %arg7[%c0, %c0_5] : memref<8x1xf32, #tpu.memory_space<vmem>>, vector<8x1xf32>
      tpu.vector_store %arg7[%c0, %c0_5], %12 {strides = array<i32>} : memref<8x1xf32, #tpu.memory_space<vmem>>, vector<8x1xf32>,
      %cst_6 = arith.constant 0.000000e+00 : f32
      %14 = vector.broadcast %cst_6 : f32 to vector<8x1xf32>
      %c0_7 = arith.constant 0 : index
      %c0_8 = arith.constant 0 : index
      %15 = vector.load %arg8[%c0_7, %c0_8] : memref<8x1xf32, #tpu.memory_space<vmem>>, vector<8x1xf32>
      tpu.vector_store %arg8[%c0_7, %c0_8], %14 {strides = array<i32>} : memref<8x1xf32, #tpu.memory_space<vmem>>, vector<8x1xf32>,
      %cst_9 = arith.constant 0.000000e+00 : f32
      %16 = vector.broadcast %cst_9 : f32 to vector<8x8xf32>
      %c0_10 = arith.constant 0 : index
      %c0_11 = arith.constant 0 : index
      %17 = vector.load %arg9[%c0_10, %c0_11] : memref<8x8xf32, #tpu.memory_space<vmem>>, vector<8x8xf32>
      tpu.vector_store %arg9[%c0_10, %c0_11], %16 {strides = array<i32>} : memref<8x8xf32, #tpu.memory_space<vmem>>, vector<8x8xf32>,
    } else {
    }
    %3 = arith.cmpi slt, %arg2, %arg1 : i32
    %4 = arith.extui %3 : i1 to i32
    %c0_i32_1 = arith.constant 0 : i32
    %5 = arith.cmpi ne, %4, %c0_i32_1 : i32
    scf.if %5 {
      %c0 = arith.constant 0 : index
      %c0_5 = arith.constant 0 : index
      %c0_6 = arith.constant 0 : index
      %12 = vector.load %arg3[%c0, %c0_5, %c0_6] : memref<1x8x8xf32, #tpu.memory_space<vmem>>, vector<1x8x8xf32>
      %13 = vector.shape_cast %12 : vector<1x8x8xf32> to vector<8x8xf32>
      %c0_7 = arith.constant 0 : index
      %c0_8 = arith.constant 0 : index
      %c0_9 = arith.constant 0 : index
      %14 = vector.load %arg4[%c0_7, %c0_8, %c0_9] : memref<1x8x8xf32, #tpu.memory_space<vmem>>, vector<1x8x8xf32>
      %15 = vector.shape_cast %14 : vector<1x8x8xf32> to vector<8x8xf32>
      %cst = arith.constant dense<0.000000e+00> : vector<8x8xf32>
      %16 = tpu.matmul %13, %15, %cst {dimension_numbers = #tpu.dot_dimension_numbers<[1], [1], [0], [0], [0, 0, 1, 0], [], []>} : vector<8x8xf32>, vector<8x8xf32>, vector<8x8xf32> -> vector<8x8xf32>
      %cst_10 = arith.constant 0.353553385 : f32
      %17 = vector.broadcast %cst_10 : f32 to vector<8x8xf32>
      %18 = arith.mulf %16, %17 : vector<8x8xf32>
      %c0_11 = arith.constant 0 : index
      %c0_12 = arith.constant 0 : index
      %19 = vector.load %arg7[%c0_11, %c0_12] : memref<8x1xf32, #tpu.memory_space<vmem>>, vector<8x1xf32>
      %cst_13 = arith.constant dense<0xFF800000> : vector<8xf32>
      %20 = vector.multi_reduction <maximumf>, %18, %cst_13 [1] : vector<8x8xf32> to vector<8xf32>
      %21 = vector.shape_cast %20 : vector<8xf32> to vector<8x1xf32>
      %22 = arith.maximumf %19, %21 : vector<8x1xf32>
      %23 = arith.subf %19, %22 : vector<8x1xf32>
      %24 = math.exp %23 : vector<8x1xf32>
      %25 = vector.broadcast %22 : vector<8x1xf32> to vector<8x8xf32>
      %26 = arith.subf %18, %25 : vector<8x8xf32>
      %27 = math.exp %26 : vector<8x8xf32>
      %c0_14 = arith.constant 0 : index
      %c0_15 = arith.constant 0 : index
      %28 = vector.load %arg8[%c0_14, %c0_15] : memref<8x1xf32, #tpu.memory_space<vmem>>, vector<8x1xf32>
      %29 = arith.mulf %24, %28 : vector<8x1xf32>
      %cst_16 = arith.constant dense<0.000000e+00> : vector<8xf32>
      %30 = vector.multi_reduction <add>, %27, %cst_16 [1] : vector<8x8xf32> to vector<8xf32>
      %31 = vector.shape_cast %30 : vector<8xf32> to vector<8x1xf32>
      %32 = arith.addf %29, %31 : vector<8x1xf32>
      %c0_17 = arith.constant 0 : index
      %c0_18 = arith.constant 0 : index
      %33 = vector.load %arg8[%c0_17, %c0_18] : memref<8x1xf32, #tpu.memory_space<vmem>>, vector<8x1xf32>
      tpu.vector_store %arg8[%c0_17, %c0_18], %32 {strides = array<i32>} : memref<8x1xf32, #tpu.memory_space<vmem>>, vector<8x1xf32>,
      %c0_19 = arith.constant 0 : index
      %c0_20 = arith.constant 0 : index
      %34 = vector.load %arg9[%c0_19, %c0_20] : memref<8x8xf32, #tpu.memory_space<vmem>>, vector<8x8xf32>
      %35 = vector.broadcast %24 : vector<8x1xf32> to vector<8x8xf32>
      %36 = arith.mulf %35, %34 : vector<8x8xf32>
      %c0_21 = arith.constant 0 : index
      %c0_22 = arith.constant 0 : index
      %c0_23 = arith.constant 0 : index
      %37 = vector.load %arg5[%c0_21, %c0_22, %c0_23] : memref<1x8x8xf32, #tpu.memory_space<vmem>>, vector<1x8x8xf32>
      %38 = vector.shape_cast %37 : vector<1x8x8xf32> to vector<8x8xf32>
      %cst_24 = arith.constant dense<0.000000e+00> : vector<8x8xf32>
      %39 = tpu.matmul %27, %38, %cst_24 {dimension_numbers = #tpu.dot_dimension_numbers<[1], [0], [0], [1], [0, 0, 1, 1], [], []>} : vector<8x8xf32>, vector<8x8xf32>, vector<8x8xf32> -> vector<8x8xf32>
      %40 = arith.addf %36, %39 : vector<8x8xf32>
      %c0_25 = arith.constant 0 : index
      %c0_26 = arith.constant 0 : index
      %41 = vector.load %arg9[%c0_25, %c0_26] : memref<8x8xf32, #tpu.memory_space<vmem>>, vector<8x8xf32>
      tpu.vector_store %arg9[%c0_25, %c0_26], %40 {strides = array<i32>} : memref<8x8xf32, #tpu.memory_space<vmem>>, vector<8x8xf32>,
      %c0_27 = arith.constant 0 : index
      %c0_28 = arith.constant 0 : index
      %42 = vector.load %arg7[%c0_27, %c0_28] : memref<8x1xf32, #tpu.memory_space<vmem>>, vector<8x1xf32>
      tpu.vector_store %arg7[%c0_27, %c0_28], %22 {strides = array<i32>} : memref<8x1xf32, #tpu.memory_space<vmem>>, vector<8x1xf32>,
    } else {
    }
    %6 = arith.cmpi eq, %arg2, %arg1 : i32
    %7 = arith.extui %6 : i1 to i32
    %c0_i32_2 = arith.constant 0 : i32
    %8 = arith.cmpi ne, %7, %c0_i32_2 : i32
    scf.if %8 {
      %c0 = arith.constant 0 : index
      %c0_5 = arith.constant 0 : index
      %c0_6 = arith.constant 0 : index
      %12 = vector.load %arg3[%c0, %c0_5, %c0_6] : memref<1x8x8xf32, #tpu.memory_space<vmem>>, vector<1x8x8xf32>
      %13 = vector.shape_cast %12 : vector<1x8x8xf32> to vector<8x8xf32>
      %c0_7 = arith.constant 0 : index
      %c0_8 = arith.constant 0 : index
      %c0_9 = arith.constant 0 : index
      %14 = vector.load %arg4[%c0_7, %c0_8, %c0_9] : memref<1x8x8xf32, #tpu.memory_space<vmem>>, vector<1x8x8xf32>
      %15 = vector.shape_cast %14 : vector<1x8x8xf32> to vector<8x8xf32>
      %cst = arith.constant dense<0.000000e+00> : vector<8x8xf32>
      %16 = tpu.matmul %13, %15, %cst {dimension_numbers = #tpu.dot_dimension_numbers<[1], [1], [0], [0], [0, 0, 1, 0], [], []>} : vector<8x8xf32>, vector<8x8xf32>, vector<8x8xf32> -> vector<8x8xf32>
      %cst_10 = arith.constant 0.353553385 : f32
      %17 = vector.broadcast %cst_10 : f32 to vector<8x8xf32>
      %18 = arith.mulf %16, %17 : vector<8x8xf32>
      %c8_i32 = arith.constant 8 : i32
      %19 = arith.muli %arg1, %c8_i32 : i32
      %c8_i32_11 = arith.constant 8 : i32
      %20 = arith.muli %arg2, %c8_i32_11 : i32
      %21 = tpu.iota {dimensions = array<i32: 0>} : vector<8x8xi32>
      %22 = vector.broadcast %19 : i32 to vector<8x8xi32>
      %23 = arith.addi %22, %21 : vector<8x8xi32>
      %24 = tpu.iota {dimensions = array<i32: 1>} : vector<8x8xi32>
      %25 = vector.broadcast %20 : i32 to vector<8x8xi32>
      %26 = arith.addi %25, %24 : vector<8x8xi32>
      %27 = arith.cmpi sge, %23, %26 : vector<8x8xi32>
      %cst_12 = arith.constant 0xFF800000 : f32
      %28 = vector.broadcast %cst_12 : f32 to vector<8x8xf32>
      %29 = arith.select %27, %18, %28 : vector<8x8xi1>, vector<8x8xf32>
      %c0_13 = arith.constant 0 : index
      %c0_14 = arith.constant 0 : index
      %30 = vector.load %arg7[%c0_13, %c0_14] : memref<8x1xf32, #tpu.memory_space<vmem>>, vector<8x1xf32>
      %cst_15 = arith.constant dense<0xFF800000> : vector<8xf32>
      %31 = vector.multi_reduction <maximumf>, %29, %cst_15 [1] : vector<8x8xf32> to vector<8xf32>
      %32 = vector.shape_cast %31 : vector<8xf32> to vector<8x1xf32>
      %33 = arith.maximumf %30, %32 : vector<8x1xf32>
      %34 = arith.subf %30, %33 : vector<8x1xf32>
      %35 = math.exp %34 : vector<8x1xf32>
      %36 = vector.broadcast %33 : vector<8x1xf32> to vector<8x8xf32>
      %37 = arith.subf %29, %36 : vector<8x8xf32>
      %38 = math.exp %37 : vector<8x8xf32>
      %c0_16 = arith.constant 0 : index
      %c0_17 = arith.constant 0 : index
      %39 = vector.load %arg8[%c0_16, %c0_17] : memref<8x1xf32, #tpu.memory_space<vmem>>, vector<8x1xf32>
      %40 = arith.mulf %35, %39 : vector<8x1xf32>
      %cst_18 = arith.constant dense<0.000000e+00> : vector<8xf32>
      %41 = vector.multi_reduction <add>, %38, %cst_18 [1] : vector<8x8xf32> to vector<8xf32>
      %42 = vector.shape_cast %41 : vector<8xf32> to vector<8x1xf32>
      %43 = arith.addf %40, %42 : vector<8x1xf32>
      %c0_19 = arith.constant 0 : index
      %c0_20 = arith.constant 0 : index
      %44 = vector.load %arg8[%c0_19, %c0_20] : memref<8x1xf32, #tpu.memory_space<vmem>>, vector<8x1xf32>
      tpu.vector_store %arg8[%c0_19, %c0_20], %43 {strides = array<i32>} : memref<8x1xf32, #tpu.memory_space<vmem>>, vector<8x1xf32>,
      %c0_21 = arith.constant 0 : index
      %c0_22 = arith.constant 0 : index
      %45 = vector.load %arg9[%c0_21, %c0_22] : memref<8x8xf32, #tpu.memory_space<vmem>>, vector<8x8xf32>
      %46 = vector.broadcast %35 : vector<8x1xf32> to vector<8x8xf32>
      %47 = arith.mulf %46, %45 : vector<8x8xf32>
      %c0_23 = arith.constant 0 : index
      %c0_24 = arith.constant 0 : index
      %c0_25 = arith.constant 0 : index
      %48 = vector.load %arg5[%c0_23, %c0_24, %c0_25] : memref<1x8x8xf32, #tpu.memory_space<vmem>>, vector<1x8x8xf32>
      %49 = vector.shape_cast %48 : vector<1x8x8xf32> to vector<8x8xf32>
      %cst_26 = arith.constant dense<0.000000e+00> : vector<8x8xf32>
      %50 = tpu.matmul %38, %49, %cst_26 {dimension_numbers = #tpu.dot_dimension_numbers<[1], [0], [0], [1], [0, 0, 1, 1], [], []>} : vector<8x8xf32>, vector<8x8xf32>, vector<8x8xf32> -> vector<8x8xf32>
      %51 = arith.addf %47, %50 : vector<8x8xf32>
      %c0_27 = arith.constant 0 : index
      %c0_28 = arith.constant 0 : index
      %52 = vector.load %arg9[%c0_27, %c0_28] : memref<8x8xf32, #tpu.memory_space<vmem>>, vector<8x8xf32>
      tpu.vector_store %arg9[%c0_27, %c0_28], %51 {strides = array<i32>} : memref<8x8xf32, #tpu.memory_space<vmem>>, vector<8x8xf32>,
      %c0_29 = arith.constant 0 : index
      %c0_30 = arith.constant 0 : index
      %53 = vector.load %arg7[%c0_29, %c0_30] : memref<8x1xf32, #tpu.memory_space<vmem>>, vector<8x1xf32>
      tpu.vector_store %arg7[%c0_29, %c0_30], %33 {strides = array<i32>} : memref<8x1xf32, #tpu.memory_space<vmem>>, vector<8x1xf32>,
    } else {
    }
    %c0_i32_3 = arith.constant 0 : i32
    %9 = arith.cmpi eq, %arg2, %c0_i32_3 : i32
    %10 = arith.extui %9 : i1 to i32
    %c0_i32_4 = arith.constant 0 : i32
    %11 = arith.cmpi ne, %10, %c0_i32_4 : i32
    scf.if %11 {
      %c0 = arith.constant 0 : index
      %c0_5 = arith.constant 0 : index
      %12 = vector.load %arg9[%c0, %c0_5] : memref<8x8xf32, #tpu.memory_space<vmem>>, vector<8x8xf32>
      %c0_6 = arith.constant 0 : index
      %c0_7 = arith.constant 0 : index
      %13 = vector.load %arg8[%c0_6, %c0_7] : memref<8x1xf32, #tpu.memory_space<vmem>>, vector<8x1xf32>
      %14 = tpu.reciprocal %13 {approx = true} : vector<8x1xf32> -> vector<8x1xf32>
      %15 = vector.broadcast %14 : vector<8x1xf32> to vector<8x8xf32>
      %16 = arith.mulf %12, %15 : vector<8x8xf32>
      %c0_8 = arith.constant 0 : index
      %c0_9 = arith.constant 0 : index
      %c0_10 = arith.constant 0 : index
      %17 = vector.load %arg6[%c0_8, %c0_9, %c0_10] : memref<1x8x8xf32, #tpu.memory_space<vmem>>, vector<1x8x8xf32>
      %18 = vector.shape_cast %17 : vector<1x8x8xf32> to vector<8x8xf32>
      %19 = vector.shape_cast %16 : vector<8x8xf32> to vector<1x8x8xf32>
      tpu.vector_store %arg6[%c0_8, %c0_9, %c0_10], %19 {strides = array<i32>} : memref<1x8x8xf32, #tpu.memory_space<vmem>>, vector<1x8x8xf32>,
    } else {
    }
    return
  }
  func.func @transform_0(%arg0: i32, %arg1: i32, %arg2: i32) -> (i32, i32, i32) {
    %c0_i32 = arith.constant 0 : i32
    %c0_i32_0 = arith.constant 0 : i32
    return %arg0, %arg1, %c0_i32 : i32, i32, i32
  }
  func.func @transform_1(%arg0: i32, %arg1: i32, %arg2: i32) -> (i32, i32, i32) {
    %0 = arith.minsi %arg1, %arg2 : i32
    %c0_i32 = arith.constant 0 : i32
    %c0_i32_0 = arith.constant 0 : i32
    return %arg0, %0, %c0_i32 : i32, i32, i32
  }
  func.func @transform_2(%arg0: i32, %arg1: i32, %arg2: i32) -> (i32, i32, i32) {
    %0 = arith.minsi %arg1, %arg2 : i32
    %c0_i32 = arith.constant 0 : i32
    %c0_i32_0 = arith.constant 0 : i32
    return %arg0, %0, %c0_i32 : i32, i32, i32
  }
  func.func @transform_3(%arg0: i32, %arg1: i32, %arg2: i32) -> (i32, i32, i32) {
    %c0_i32 = arith.constant 0 : i32
    %c0_i32_0 = arith.constant 0 : i32
    return %arg0, %arg1, %c0_i32 : i32, i32, i32
  }
}

module attributes {stable_mosaic.version = 11 : i64} {
  func.func @_linear_bias_kernel(%arg0: i32, %arg1: memref<16x32xf32, #tpu.memory_space<vmem>>, %arg2: memref<32x32xf32, #tpu.memory_space<vmem>>, %arg3: memref<1x32xf32, #tpu.memory_space<vmem>>, %arg4: memref<16x32xf32, #tpu.memory_space<vmem>>) attributes {dimension_semantics = [#tpu.dimension_semantics<parallel>], iteration_bounds = array<i64: 1>, scalar_prefetch = 0 : i64, scratch_operands = 0 : i64, tpu.core_type = #tpu.core_type<tc>, window_params = [{transform_indices = @transform_0, window_bounds = array<i64: 16, 32>}, {pipeline_mode = #tpu.pipeline_mode<synchronous>, transform_indices = @transform_1, window_bounds = array<i64: 32, 32>}, {pipeline_mode = #tpu.pipeline_mode<synchronous>, transform_indices = @transform_2, window_bounds = array<i64: 1, 32>}, {transform_indices = @transform_3, window_bounds = array<i64: 16, 32>}]} {
    %c0 = arith.constant 0 : index
    %c0_0 = arith.constant 0 : index
    %0 = vector.load %arg1[%c0, %c0_0] : memref<16x32xf32, #tpu.memory_space<vmem>>, vector<16x32xf32>
    %c0_1 = arith.constant 0 : index
    %c0_2 = arith.constant 0 : index
    %1 = vector.load %arg2[%c0_1, %c0_2] : memref<32x32xf32, #tpu.memory_space<vmem>>, vector<32x32xf32>
    %cst = arith.constant dense<0.000000e+00> : vector<16x32xf32>
    %2 = tpu.matmul %0, %1, %cst {dimension_numbers = #tpu.dot_dimension_numbers<[1], [0], [0], [1], [0, 0, 1, 1], [], []>} : vector<16x32xf32>, vector<32x32xf32>, vector<16x32xf32> -> vector<16x32xf32>
    %c0_3 = arith.constant 0 : index
    %c0_4 = arith.constant 0 : index
    %3 = vector.load %arg3[%c0_3, %c0_4] : memref<1x32xf32, #tpu.memory_space<vmem>>, vector<1x32xf32>
    %4 = vector.broadcast %3 : vector<1x32xf32> to vector<16x32xf32>
    %5 = arith.addf %2, %4 : vector<16x32xf32>
    %c0_5 = arith.constant 0 : index
    %c0_6 = arith.constant 0 : index
    %6 = vector.load %arg4[%c0_5, %c0_6] : memref<16x32xf32, #tpu.memory_space<vmem>>, vector<16x32xf32>
    tpu.vector_store %arg4[%c0_5, %c0_6], %5 {strides = array<i32>} : memref<16x32xf32, #tpu.memory_space<vmem>>, vector<16x32xf32>,
    return
  }
  func.func @transform_0(%arg0: i32) -> (i32, i32) {
    %c0_i32 = arith.constant 0 : i32
    %c0_i32_0 = arith.constant 0 : i32
    return %arg0, %c0_i32 : i32, i32
  }
  func.func @transform_1(%arg0: i32) -> (i32, i32) {
    %c0_i32 = arith.constant 0 : i32
    %c0_i32_0 = arith.constant 0 : i32
    %c0_i32_1 = arith.constant 0 : i32
    return %c0_i32, %c0_i32_0 : i32, i32
  }
  func.func @transform_2(%arg0: i32) -> (i32, i32) {
    %c0_i32 = arith.constant 0 : i32
    %c0_i32_0 = arith.constant 0 : i32
    %c0_i32_1 = arith.constant 0 : i32
    return %c0_i32, %c0_i32_0 : i32, i32
  }
  func.func @transform_3(%arg0: i32) -> (i32, i32) {
    %c0_i32 = arith.constant 0 : i32
    %c0_i32_0 = arith.constant 0 : i32
    return %arg0, %c0_i32 : i32, i32
  }
}

</mosaic_0001>

<llo_original>
// kernel: causal_self_attention.3
$region0: #{causal_self_attention.3}
  #allocation0 [shape = 'u32[]', space=smem, size = 0x4, offset = 0x4, fixed_abs, tag = 'smem constant byte address 0x4 - core index']
  #allocation1 [shape = 'u32[72,128]{1,0:T(1,128)}', space=vmem, size = 0x9000, scoped, tag = 'internal scratch']
  %s0 = inlined_call_operand.hbm [shape: f32[16,32], index: 0, kind: input, shape index: {}]
  %s1 = inlined_call_operand.hbm [shape: f32[32,96], index: 1, kind: input, shape index: {}]
  %s2 = inlined_call_operand.vmem [shape: f32[1,96], index: 2, kind: input, shape index: {}]
  %s3 = inlined_call_operand.vmem [shape: f32[16,96], index: 3, kind: output, shape index: {}]
  %s4 = sld [smem:[#allocation0]]
  $region30: #{causal_self_attention.3} parent=0
    _
  %s6 = ssub.s32 1, %s4
  %s7 = scalar_select 0, %s6, %s4
  $region1: #{causal_self_attention.3} parent=0
    #allocation2 [shape = 'u8[8192]{0}', space=vmem, size = 0x2000, scoped, tag = 'input window, operand 0, single buffered']
    #allocation3 [shape = 's32[1]{0}', space=sflag, size = 0x4, scoped, tag = 'scoped memory for causal_self_attention.3']
    #allocation4 [shape = 'u8[16384]{0}', space=vmem, size = 0x4000, scoped, tag = 'input window, operand 1, single buffered']
    #allocation5 [shape = 's32[1]{0}', space=sflag, size = 0x4, scoped, tag = 'scoped memory for causal_self_attention.3']
    %8 = vsyncpa [#allocation3], 0
    %9 = vsyncpa [#allocation5], 0
    // Predicated region
    $region2: #{causal_self_attention.3} parent=1 // pred_check
      _
    $region3: #{causal_self_attention.3} parent=1 // pred_check_branch
      %11 = sbr.rel (0) target = $region5
    $region4: #{causal_self_attention.3} parent=1 // pred_region
      %13 = vsyncadd [#allocation3], 0
      %s14 = sshll.u32 %s0, 4
      %s15 = int_to_ptr.hbm [resolvable:$true] %s14
      %s16 = sshll.u32 [#allocation2], 4
      %s17 = int_to_ptr.vmem [resolvable:$true] %s16
      %22 = dma.hbm_to_vmem [thread:$0]  %s15, 256, %s17, [#allocation3], 128, 128, 8
    $region5: #{causal_self_attention.3} parent=1 // pred_fallthru
      _
    // Predicated region
    $region6: #{causal_self_attention.3} parent=1 // pred_check
      _
    $region7: #{causal_self_attention.3} parent=1 // pred_check_branch
      %24 = sbr.rel (0) target = $region9
    $region8: #{causal_self_attention.3} parent=1 // pred_region
      %26 = vsyncadd [#allocation5], 0
      %s27 = sshll.u32 %s1, 4
      %s28 = int_to_ptr.hbm [resolvable:$true] %s27
      %s29 = sshll.u32 [#allocation4], 4
      %s30 = int_to_ptr.vmem [resolvable:$true] %s29
      %35 = dma.hbm_to_vmem [thread:$0]  %s28, 512, %s30, [#allocation5], 128, 128, 8
    $region9: #{causal_self_attention.3} parent=1 // pred_fallthru
      _
    // Predicated region
    $region10: #{causal_self_attention.3} parent=1 // pred_check
      _
    $region11: #{causal_self_attention.3} parent=1 // pred_check_branch
      %37 = sbr.rel (0) target = $region13
    $region12: #{causal_self_attention.3} parent=1 // pred_region
      _
    $region13: #{causal_self_attention.3} parent=1 // pred_fallthru
      _
    // Predicated region
    $region14: #{causal_self_attention.3} parent=1 // pred_check
      _
    $region15: #{causal_self_attention.3} parent=1 // pred_check_branch
      %39 = sbr.rel (0) target = $region17
    $region16: #{causal_self_attention.3} parent=1 // pred_region
      %41 = dma.done [#allocation3], 256
    $region17: #{causal_self_attention.3} parent=1 // pred_fallthru
      _
    // Predicated region
    $region18: #{causal_self_attention.3} parent=1 // pred_check
      _
    $region19: #{causal_self_attention.3} parent=1 // pred_check_branch
      %43 = sbr.rel (0) target = $region21
    $region20: #{causal_self_attention.3} parent=1 // pred_region
      %45 = dma.done [#allocation5], 512
    $region21: #{causal_self_attention.3} parent=1 // pred_fallthru
      _
    %v46 = vld [vmem:[#allocation2] sm:$0xff]
    %v47 = vld [vmem:[#allocation2 + $0x8] sm:$0xff]
    %v48 = vld [vmem:[#allocation4] sm:$0xff]
    %v49 = vld [vmem:[#allocation4 + $0x8] sm:$0xff]
    %v50 = vld [vmem:[#allocation4 + $0x10] sm:$0xff]
    %v51 = vld [vmem:[#allocation4 + $0x18] sm:$0xff]
    %v52 = vld [vmem:[%s2] sm:$0x1]
    %v54 = vperm.slane %v52, 0
    %vm56 = vcmask 261120
    %v58 = vsel %vm56, %v46, 0
    %v61 = vsel %vm56, %v47, 0
    %63 = vmatpush.msra.mxu0 0.0
    %64 = vmatpush.msra.mxu0 0.0
    %65 = vmatpush.msra.mxu0 0.0
    %66 = vmatpush.msra.mxu0 0.0
    %67 = vmatpush.msra.mxu0 0.0
    %68 = vmatpush.msra.mxu0 0.0
    %69 = vmatpush.msra.mxu0 0.0
    %70 = vmatpush.msra.mxu0 0.0
    %71 = vmatpush.msra.mxu0 0.0
    %72 = vmatpush.msra.mxu0 0.0
    %73 = vmatpush.msra.mxu0 0.0
    %74 = vmatpush.msra.mxu0 0.0
    %75 = vmatpush.msra.mxu0 %v51
    %76 = vmatpush.msra.mxu0 %v50
    %77 = vmatpush.msra.mxu0 %v49
    %78 = vmatpush.msra.mxu0 %v48
    %79 = vmatmul.f32.gmra.mxu0 %v58
    %v80 = vpop.f32.mrf.mxu0
    %v81 = vadd.f32 %v54, %v80
    %82 = vmatmul.f32.gmra.mxu0 %v61
    %v83 = vpop.f32.mrf.mxu0
    %v84 = vadd.f32 %v54, %v83
    %85 = vdwg.mxu0
    %vm86 = vcmask 785408
    %87 = vst.msk [vmem:[%s3] sm:$0xff] %vm86, %v81
    %88 = vst.msk [vmem:[%s3 + $0x8] sm:$0xff] %vm86, %v84
    // Predicated region
    $region22: #{causal_self_attention.3} parent=1 // pred_check
      _
    $region23: #{causal_self_attention.3} parent=1 // pred_check_branch
      %90 = sbr.rel (0) target = $region25
    $region24: #{causal_self_attention.3} parent=1 // pred_region
      _
    $region25: #{causal_self_attention.3} parent=1 // pred_fallthru
      _
    // Predicated region
    $region26: #{causal_self_attention.3} parent=1 // pred_check
      _
    $region27: #{causal_self_attention.3} parent=1 // pred_check_branch
      %92 = sbr.rel (0) target = $region29
    $region28: #{causal_self_attention.3} parent=1 // pred_region
      _
    $region29: #{causal_self_attention.3} parent=1 // pred_fallthru
      _
    %93 = vsyncpa [#allocation3], 1
    %94 = vsyncpa [#allocation5], 1

// kernel: causal_self_attention.5
$region0: #{causal_self_attention.5}
  #allocation0 [shape = 'u32[]', space=smem, size = 0x4, offset = 0x4, fixed_abs, tag = 'smem constant byte address 0x4 - core index']
  #allocation1 [shape = 'u32[72,128]{1,0:T(1,128)}', space=vmem, size = 0x9000, scoped, tag = 'internal scratch']
  %s0 = inlined_call_operand.vmem [shape: f32[16,32], index: 0, kind: input, shape index: {}]
  %s1 = inlined_call_operand.vmem [shape: f32[32,32], index: 1, kind: input, shape index: {}]
  %s2 = inlined_call_operand.vmem [shape: f32[1,32], index: 2, kind: input, shape index: {}]
  %s3 = inlined_call_operand.hbm [shape: f32[16,32], index: 3, kind: output, shape index: {}]
  %s4 = sld [smem:[#allocation0]]
  $region22: #{causal_self_attention.5} parent=0
    _
  %s6 = ssub.s32 1, %s4
  %s7 = scalar_select 0, %s6, %s4
  $region1: #{causal_self_attention.5} parent=0
    #allocation2 [shape = 'u8[8192]{0}', space=vmem, size = 0x2000, scoped, tag = 'output window, operand 0, single buffered']
    #allocation3 [shape = 's32[1]{0}', space=sflag, size = 0x4, scoped, tag = 'scoped memory for causal_self_attention.5']
    %8 = vsyncpa [#allocation3], 0
    // Predicated region
    $region2: #{causal_self_attention.5} parent=1 // pred_check
      _
    $region3: #{causal_self_attention.5} parent=1 // pred_check_branch
      %10 = sbr.rel (0) target = $region5
    $region4: #{causal_self_attention.5} parent=1 // pred_region
      _
    $region5: #{causal_self_attention.5} parent=1 // pred_fallthru
      _
    // Predicated region
    $region6: #{causal_self_attention.5} parent=1 // pred_check
      _
    $region7: #{causal_self_attention.5} parent=1 // pred_check_branch
      %12 = sbr.rel (0) target = $region9
    $region8: #{causal_self_attention.5} parent=1 // pred_region
      _
    $region9: #{causal_self_attention.5} parent=1 // pred_fallthru
      _
    // Predicated region
    $region10: #{causal_self_attention.5} parent=1 // pred_check
      _
    $region11: #{causal_self_attention.5} parent=1 // pred_check_branch
      %14 = sbr.rel (0) target = $region13
    $region12: #{causal_self_attention.5} parent=1 // pred_region
      _
    $region13: #{causal_self_attention.5} parent=1 // pred_fallthru
      _
    %v15 = vld [vmem:[%s0] sm:$0xff]
    %v16 = vld [vmem:[%s0 + $0x8] sm:$0xff]
    %v17 = vld [vmem:[%s1] sm:$0xff]
    %v18 = vld [vmem:[%s1 + $0x8] sm:$0xff]
    %v19 = vld [vmem:[%s1 + $0x10] sm:$0xff]
    %v20 = vld [vmem:[%s1 + $0x18] sm:$0xff]
    %v21 = vld [vmem:[%s2] sm:$0x1]
    %v23 = vperm.slane %v21, 0
    %vm25 = vcmask 261120
    %v27 = vsel %vm25, %v15, 0
    %v30 = vsel %vm25, %v16, 0
    %32 = vmatpush.msra.mxu0 0.0
    %33 = vmatpush.msra.mxu0 0.0
    %34 = vmatpush.msra.mxu0 0.0
    %35 = vmatpush.msra.mxu0 0.0
    %36 = vmatpush.msra.mxu0 0.0
    %37 = vmatpush.msra.mxu0 0.0
    %38 = vmatpush.msra.mxu0 0.0
    %39 = vmatpush.msra.mxu0 0.0
    %40 = vmatpush.msra.mxu0 0.0
    %41 = vmatpush.msra.mxu0 0.0
    %42 = vmatpush.msra.mxu0 0.0
    %43 = vmatpush.msra.mxu0 0.0
    %44 = vmatpush.msra.mxu0 %v20
    %45 = vmatpush.msra.mxu0 %v19
    %46 = vmatpush.msra.mxu0 %v18
    %47 = vmatpush.msra.mxu0 %v17
    %48 = vmatmul.f32.gmra.mxu0 %v27
    %v49 = vpop.f32.mrf.mxu0
    %v50 = vadd.f32 %v23, %v49
    %51 = vmatmul.f32.gmra.mxu0 %v30
    %v52 = vpop.f32.mrf.mxu0
    %v53 = vadd.f32 %v23, %v52
    %54 = vdwg.mxu0
    %55 = vst.msk [vmem:[#allocation2] sm:$0xff] %vm25, %v50
    %56 = vst.msk [vmem:[#allocation2 + $0x8] sm:$0xff] %vm25, %v53
    // Predicated region
    $region14: #{causal_self_attention.5} parent=1 // pred_check
      _
    $region15: #{causal_self_attention.5} parent=1 // pred_check_branch
      %58 = sbr.rel (0) target = $region17
    $region16: #{causal_self_attention.5} parent=1 // pred_region
      %60 = vsyncadd [#allocation3], 0
      %s61 = sshll.u32 [#allocation2], 4
      %s62 = int_to_ptr.vmem [resolvable:$true] %s61
      %s63 = sshll.u32 %s3, 4
      %s64 = int_to_ptr.hbm [resolvable:$true] %s63
      %69 = dma.vmem_to_hbm [thread:$0]  %s62, 256, %s64, [#allocation3], 128, 128, 8
    $region17: #{causal_self_attention.5} parent=1 // pred_fallthru
      _
    // Predicated region
    $region18: #{causal_self_attention.5} parent=1 // pred_check
      _
    $region19: #{causal_self_attention.5} parent=1 // pred_check_branch
      %71 = sbr.rel (0) target = $region21
    $region20: #{causal_self_attention.5} parent=1 // pred_region
      %73 = dma.done [#allocation3], 256
    $region21: #{causal_self_attention.5} parent=1 // pred_fallthru
      _
    %74 = vsyncpa [#allocation3], 1

// kernel: causal_self_attention.4
$region0: #{causal_self_attention.4}
  #allocation0 [shape = 'u32[]', space=smem, size = 0x4, offset = 0x4, fixed_abs, tag = 'smem constant byte address 0x4 - core index']
  #allocation1 [shape = 'u32[72,128]{1,0:T(1,128)}', space=vmem, size = 0x9000, scoped, tag = 'internal scratch']
  #allocation2 [shape = 'f32[8,1]{1,0:T(8,128)}', space=vmem, size = 0x1000, scoped, tag = 'scratch operand']
  #allocation3 [shape = 'f32[8,1]{1,0:T(8,128)}', space=vmem, size = 0x1000, scoped, tag = 'scratch operand']
  #allocation4 [shape = 'f32[8,8]{1,0:T(8,128)}', space=vmem, size = 0x1000, scoped, tag = 'scratch operand']
  %s0 = inlined_call_operand.vmem [shape: f32[8,8,8], index: 0, kind: input, shape index: {}]
  %s1 = inlined_call_operand.vmem [shape: f32[8,8,8], index: 1, kind: input, shape index: {}]
  %s2 = inlined_call_operand.vmem [shape: f32[8,8,8], index: 2, kind: input, shape index: {}]
  %s3 = inlined_call_operand.vmem [shape: f32[8,8,8], index: 3, kind: output, shape index: {}]
  %s4 = sld [smem:[#allocation0]]
  $region61: #{causal_self_attention.4} parent=0
    _
  %s6 = ssub.s32 1, %s4
  %s7 = scalar_select 0, %s6, %s4
  loop: start=0, step=1, limit=10
  $region2: #{causal_self_attention.4} parent=0 // loop_pre_header
    _
  $region3: #{causal_self_attention.4} parent=0 // loop_header
    %s9 = sphi 0, %s13
    %p10 = scmp.ge.s32.totalorder %s9, 10
    %s16 = sphi 0, %s35
    %s17 = sphi 0, %s31
    %s18 = sphi 0, %s27
    %s19 = sphi 0, %s16
    %s20 = sphi 0, %s17
    %s21 = sphi 0, %s18
    %s22 = sphi 0, %s19
    %s23 = sphi 0, %s20
    %s24 = sphi 0, %s21
    %s40 = sphi 0, %s42
    %s43 = sphi 0, %s40
    %s44 = sphi 0, %s43
    %s60 = sphi 0, %s44
    %s72 = sphi 0, %s74
    %s75 = sphi 0, %s72
    %s76 = sphi 0, %s75
    %s92 = sphi 0, %s76
    %s104 = sphi 0, %s106
    %s107 = sphi 0, %s104
    %s108 = sphi 0, %s107
    %s124 = sphi 0, %s108
    %s132 = sphi 0, %s134
    %s135 = sphi 0, %s132
    %s136 = sphi 0, %s135
    %s152 = sphi 0, %s136
  $region4: #{causal_self_attention.4} parent=0 // loop_header_branch
    %12 = sbr.rel (%p10) target = $region8
  $region5: #{causal_self_attention.4} parent=0 // loop_body
    %s14 = ssub.s32 %s9, 1
    %s15 = ssub.s32 %s9, 2
    %s25 = sadd.s32 1, %s18
    %p26 = scmp.ge.s32.totalorder %s25, 1
    %s27 = scalar_select %p26, 0, %s25
    %s28 = sadd.s32 1, %s17
    %s29 = scalar_select %p26, %s28, %s17
    %p30 = scmp.ge.s32.totalorder %s29, 1
    %s31 = scalar_select %p30, 0, %s29
    %s32 = sadd.s32 1, %s16
    %s33 = scalar_select %p30, %s32, %s16
    %p34 = scmp.ge.s32.totalorder %s33, 8
    %s35 = scalar_select %p34, 0, %s33
    %s36 = ssub.s32 %s16, %s35
    %s37 = ssub.s32 %s17, %s31
    %s38 = sor.u32 %s36, %s37
    %p39 = scmp.eq.s32.totalorder %s38, 0
    %s41 = sadd.s32 %s40, 1
    %s42 = scalar_select %p39, %s40, %s41
    %p45 = pneg %p39
    %p46 = scmp.eq.s32.totalorder %s9, 7
    %p47 = por %p45, %p46
    %p48 = scmp.ne.s32.totalorder %s40, %s43
    %p49 = scmp.eq.s32.totalorder %s9, 0
    %p50 = por %p48, %p49
    %p51 = scmp.ne.s32.totalorder %s40, %s43
    %p52 = scmp.eq.s32.totalorder %s14, 7
    %p53 = por %p51, %p52
    %p54 = scmp.ne.s32.totalorder %s43, %s44
    %p55 = scmp.eq.s32.totalorder %s14, 0
    %p56 = por %p54, %p55
    %p57 = scmp.ne.s32.totalorder %s43, %s44
    %p58 = scmp.eq.s32.totalorder %s15, 7
    %p59 = por %p57, %p58
    %p61 = scmp.ne.s32.totalorder %s44, %s60
    %p62 = scmp.eq.s32.totalorder %s15, 0
    %p63 = por %p61, %p62
    %p64 = scmp.lt.s32.totalorder %s17, %s18
    %s65 = scalar_select %p64, %s17, %s18
    %p66 = scmp.lt.s32.totalorder %s31, %s27
    %s67 = scalar_select %p66, %s31, %s27
    %s68 = ssub.s32 %s16, %s35
    %s69 = ssub.s32 %s65, %s67
    %s70 = sor.u32 %s68, %s69
    %p71 = scmp.eq.s32.totalorder %s70, 0
    %s73 = sadd.s32 %s72, 1
    %s74 = scalar_select %p71, %s72, %s73
    %p77 = pneg %p71
    %p78 = scmp.eq.s32.totalorder %s9, 7
    %p79 = por %p77, %p78
    %p80 = scmp.ne.s32.totalorder %s72, %s75
    %p81 = scmp.eq.s32.totalorder %s9, 0
    %p82 = por %p80, %p81
    %p83 = scmp.ne.s32.totalorder %s72, %s75
    %p84 = scmp.eq.s32.totalorder %s14, 7
    %p85 = por %p83, %p84
    %p86 = scmp.ne.s32.totalorder %s75, %s76
    %p87 = scmp.eq.s32.totalorder %s14, 0
    %p88 = por %p86, %p87
    %p89 = scmp.ne.s32.totalorder %s75, %s76
    %p90 = scmp.eq.s32.totalorder %s15, 7
    %p91 = por %p89, %p90
    %p93 = scmp.ne.s32.totalorder %s76, %s92
    %p94 = scmp.eq.s32.totalorder %s15, 0
    %p95 = por %p93, %p94
    %p96 = scmp.lt.s32.totalorder %s17, %s18
    %s97 = scalar_select %p96, %s17, %s18
    %p98 = scmp.lt.s32.totalorder %s31, %s27
    %s99 = scalar_select %p98, %s31, %s27
    %s100 = ssub.s32 %s16, %s35
    %s101 = ssub.s32 %s97, %s99
    %s102 = sor.u32 %s100, %s101
    %p103 = scmp.eq.s32.totalorder %s102, 0
    %s105 = sadd.s32 %s104, 1
    %s106 = scalar_select %p103, %s104, %s105
    %p109 = pneg %p103
    %p110 = scmp.eq.s32.totalorder %s9, 7
    %p111 = por %p109, %p110
    %p112 = scmp.ne.s32.totalorder %s104, %s107
    %p113 = scmp.eq.s32.totalorder %s9, 0
    %p114 = por %p112, %p113
    %p115 = scmp.ne.s32.totalorder %s104, %s107
    %p116 = scmp.eq.s32.totalorder %s14, 7
    %p117 = por %p115, %p116
    %p118 = scmp.ne.s32.totalorder %s107, %s108
    %p119 = scmp.eq.s32.totalorder %s14, 0
    %p120 = por %p118, %p119
    %p121 = scmp.ne.s32.totalorder %s107, %s108
    %p122 = scmp.eq.s32.totalorder %s15, 7
    %p123 = por %p121, %p122
    %p125 = scmp.ne.s32.totalorder %s108, %s124
    %p126 = scmp.eq.s32.totalorder %s15, 0
    %p127 = por %p125, %p126
    %s128 = ssub.s32 %s16, %s35
    %s129 = ssub.s32 %s17, %s31
    %s130 = sor.u32 %s128, %s129
    %p131 = scmp.eq.s32.totalorder %s130, 0
    %s133 = sadd.s32 %s132, 1
    %s134 = scalar_select %p131, %s132, %s133
    %p137 = pneg %p131
    %p138 = scmp.eq.s32.totalorder %s9, 7
    %p139 = por %p137, %p138
    %p140 = scmp.ne.s32.totalorder %s132, %s135
    %p141 = scmp.eq.s32.totalorder %s9, 0
    %p142 = por %p140, %p141
    %p143 = scmp.ne.s32.totalorder %s132, %s135
    %p144 = scmp.eq.s32.totalorder %s14, 7
    %p145 = por %p143, %p144
    %p146 = scmp.ne.s32.totalorder %s135, %s136
    %p147 = scmp.eq.s32.totalorder %s14, 0
    %p148 = por %p146, %p147
    %p149 = scmp.ne.s32.totalorder %s135, %s136
    %p150 = scmp.eq.s32.totalorder %s15, 7
    %p151 = por %p149, %p150
    %p153 = scmp.ne.s32.totalorder %s136, %s152
    %p154 = scmp.eq.s32.totalorder %s15, 0
    %p155 = por %p153, %p154
    %p156 = scmp.le.s32.totalorder 1, %s9
    %p157 = scmp.lt.s32.totalorder %s9, 9
    %p158 = pnand %p156, %p157
    %p159 = pneg %p158
    // Predicated region
    $region9: #{causal_self_attention.4} parent=5 // pred_check
      _
    $region10: #{causal_self_attention.4} parent=5 // pred_check_branch
      %161 = sbr.rel (%p158) target = $region12
    $region11: #{causal_self_attention.4} parent=5 // pred_region
      %s162 = ssub.s32 %s9, 1
    $region12: #{causal_self_attention.4} parent=5 // pred_fallthru
      _
    %p163 = scmp.lt.s32.totalorder %s9, 8
    // Predicated region
    $region13: #{causal_self_attention.4} parent=5 // pred_check
      %p164 = pneg %p163
    $region14: #{causal_self_attention.4} parent=5 // pred_check_branch
      %166 = sbr.rel (%p164) target = $region16
    $region15: #{causal_self_attention.4} parent=5 // pred_region
      // Predicated region
      $region17: #{causal_self_attention.4} parent=15 // pred_check
        %p167 = pneg %p50
      $region18: #{causal_self_attention.4} parent=15 // pred_check_branch
        %169 = sbr.rel (%p167) target = $region20
      $region19: #{causal_self_attention.4} parent=15 // pred_region
        %p170 = scmp.lt.s32.totalorder %s16, 7
        %s171 = scalar_select %p170, %s16, 7
        %p172 = scmp.lt.s32.totalorder %s17, 0
        %s173 = scalar_select %p172, %s17, 0
        %s174 = sadd.s32 %s173, %s171
        %s175 = smul.addr %s174, 8
        %s176 = scalar_lea.vmem %s0, %s175
      $region20: #{causal_self_attention.4} parent=15 // pred_fallthru
        _
      // Predicated region
      $region21: #{causal_self_attention.4} parent=15 // pred_check
        %p177 = pneg %p82
      $region22: #{causal_self_attention.4} parent=15 // pred_check_branch
        %179 = sbr.rel (%p177) target = $region24
      $region23: #{causal_self_attention.4} parent=15 // pred_region
        %p180 = scmp.lt.s32.totalorder %s17, %s18
        %s181 = scalar_select %p180, %s17, %s18
        %p182 = scmp.lt.s32.totalorder %s16, 7
        %s183 = scalar_select %p182, %s16, 7
        %p184 = scmp.lt.s32.totalorder %s181, 0
        %s185 = scalar_select %p184, %s181, 0
        %s186 = sadd.s32 %s185, %s183
        %s187 = smul.addr %s186, 8
        %s188 = scalar_lea.vmem %s1, %s187
        %p189 = scmp.lt.s32.totalorder %s17, %s18
        %s190 = scalar_select %p189, %s17, %s18
      $region24: #{causal_self_attention.4} parent=15 // pred_fallthru
        _
      // Predicated region
      $region25: #{causal_self_attention.4} parent=15 // pred_check
        %p191 = pneg %p114
      $region26: #{causal_self_attention.4} parent=15 // pred_check_branch
        %193 = sbr.rel (%p191) target = $region28
      $region27: #{causal_self_attention.4} parent=15 // pred_region
        %p194 = scmp.lt.s32.totalorder %s17, %s18
        %s195 = scalar_select %p194, %s17, %s18
        %p196 = scmp.lt.s32.totalorder %s16, 7
        %s197 = scalar_select %p196, %s16, 7
        %p198 = scmp.lt.s32.totalorder %s195, 0
        %s199 = scalar_select %p198, %s195, 0
        %s200 = sadd.s32 %s199, %s197
        %s201 = smul.addr %s200, 8
        %s202 = scalar_lea.vmem %s2, %s201
        %p203 = scmp.lt.s32.totalorder %s17, %s18
        %s204 = scalar_select %p203, %s17, %s18
      $region28: #{causal_self_attention.4} parent=15 // pred_fallthru
        _
    $region16: #{causal_self_attention.4} parent=5 // pred_fallthru
      _
    %p205 = scmp.le.s32.totalorder 1, %s9
    %p206 = scmp.lt.s32.totalorder %s9, 9
    %p207 = pnand %p205, %p206
    %p208 = pneg %p207
    // Predicated region
    $region29: #{causal_self_attention.4} parent=5 // pred_check
      _
    $region30: #{causal_self_attention.4} parent=5 // pred_check_branch
      %210 = sbr.rel (%p207) target = $region32
    $region31: #{causal_self_attention.4} parent=5 // pred_region
      %s211 = ssub.s32 %s9, 1
      %p212 = scmp.lt.s32.totalorder %s19, 7
      %s213 = scalar_select %p212, %s19, 7
      %p214 = scmp.lt.s32.totalorder %s20, 0
      %s215 = scalar_select %p214, %s20, 0
      %s216 = sadd.s32 %s215, %s213
      %s217 = smul.addr %s216, 8
      %s218 = scalar_lea.vmem %s0, %s217
      %p219 = pneg %p56
      %p220 = pneg %p53
      %p221 = scmp.lt.s32.totalorder %s20, %s21
      %s222 = scalar_select %p221, %s20, %s21
      %p223 = scmp.lt.s32.totalorder %s19, 7
      %s224 = scalar_select %p223, %s19, 7
      %p225 = scmp.lt.s32.totalorder %s222, 0
      %s226 = scalar_select %p225, %s222, 0
      %s227 = sadd.s32 %s226, %s224
      %s228 = smul.addr %s227, 8
      %s229 = scalar_lea.vmem %s1, %s228
      %p230 = pneg %p88
      %p231 = pneg %p85
      %p232 = scmp.lt.s32.totalorder %s20, %s21
      %s233 = scalar_select %p232, %s20, %s21
      %p234 = scmp.lt.s32.totalorder %s19, 7
      %s235 = scalar_select %p234, %s19, 7
      %p236 = scmp.lt.s32.totalorder %s233, 0
      %s237 = scalar_select %p236, %s233, 0
      %s238 = sadd.s32 %s237, %s235
      %s239 = smul.addr %s238, 8
      %s240 = scalar_lea.vmem %s2, %s239
      %p241 = pneg %p120
      %p242 = pneg %p117
      %p243 = pneg %p148
      %p244 = pneg %p145
      %p245 = scmp.lt.s32.totalorder %s19, 7
      %s246 = scalar_select %p245, %s19, 7
      %p247 = scmp.lt.s32.totalorder %s20, 0
      %s248 = scalar_select %p247, %s20, 0
      %s249 = sadd.s32 %s248, %s246
      %s250 = smul.addr %s249, 8
      %s251 = scalar_lea.vmem %s3, %s250
      %p252 = scmp.lt.s32.totalorder %s19, 7
      %s253 = scalar_select %p252, %s19, 7
      %p254 = scmp.lt.s32.totalorder %s20, 0
      %s255 = scalar_select %p254, %s20, 0
      %s256 = sadd.s32 %s255, %s253
      %s257 = smul.addr %s256, 8
      %s258 = scalar_lea.vmem %s0, %s257
      %p259 = scmp.lt.s32.totalorder %s20, %s21
      %s260 = scalar_select %p259, %s20, %s21
      %p261 = scmp.lt.s32.totalorder %s19, 7
      %s262 = scalar_select %p261, %s19, 7
      %p263 = scmp.lt.s32.totalorder %s260, 0
      %s264 = scalar_select %p263, %s260, 0
      %s265 = sadd.s32 %s264, %s262
      %s266 = smul.addr %s265, 8
      %s267 = scalar_lea.vmem %s1, %s266
      %p268 = scmp.lt.s32.totalorder %s20, %s21
      %s269 = scalar_select %p268, %s20, %s21
      %p270 = scmp.lt.s32.totalorder %s20, %s21
      %s271 = scalar_select %p270, %s20, %s21
      %p272 = scmp.lt.s32.totalorder %s19, 7
      %s273 = scalar_select %p272, %s19, 7
      %p274 = scmp.lt.s32.totalorder %s271, 0
      %s275 = scalar_select %p274, %s271, 0
      %s276 = sadd.s32 %s275, %s273
      %s277 = smul.addr %s276, 8
      %s278 = scalar_lea.vmem %s2, %s277
      %p279 = scmp.lt.s32.totalorder %s20, %s21
      %s280 = scalar_select %p279, %s20, %s21
      %p281 = scmp.lt.s32.totalorder %s19, 7
      %s282 = scalar_select %p281, %s19, 7
      %p283 = scmp.lt.s32.totalorder %s20, 0
      %s284 = scalar_select %p283, %s20, 0
      %s285 = sadd.s32 %s284, %s282
      %s286 = smul.addr %s285, 8
      %s287 = scalar_lea.vmem %s3, %s286
      %p288 = scmp.eq.s32.totalorder %s21, 0
      // Predicated region
      $region33: #{causal_self_attention.4} parent=31 // pred_check
        %p289 = pneg %p288
      $region34: #{causal_self_attention.4} parent=31 // pred_check_branch
        %291 = sbr.rel (%p289) target = $region36
      $region35: #{causal_self_attention.4} parent=31 // pred_region
        %vm292 = vcmask 7168
        %293 = vst.msk [vmem:[#allocation2] sm:$0xff] %vm292, -inf
        %294 = vst.msk [vmem:[#allocation3] sm:$0xff] %vm292, 0.0
        %vm295 = vcmask 64512
        %296 = vst.msk [vmem:[#allocation4] sm:$0xff] %vm295, 0.0
      $region36: #{causal_self_attention.4} parent=31 // pred_fallthru
        _
      %p297 = scmp.lt.s32.totalorder %s21, %s20
      // Predicated region
      $region37: #{causal_self_attention.4} parent=31 // pred_check
        %p298 = pneg %p297
      $region38: #{causal_self_attention.4} parent=31 // pred_check_branch
        %300 = sbr.rel (%p298) target = $region40
      $region39: #{causal_self_attention.4} parent=31 // pred_region
        %v301 = vld [vmem:[%s258] sm:$0xff]
        %v302 = vld [vmem:[%s267] sm:$0xff]
        %vm303 = vcmask 64512
        %v305 = vsel %vm303, %v301, 0
        %v308 = vsel %vm303, %v302, 0
        %310 = vmatpush.xpose.msra.mxu0 0.0
        %311 = vmatpush.xpose.msra.mxu0 0.0
        %312 = vmatpush.xpose.msra.mxu0 0.0
        %313 = vmatpush.xpose.msra.mxu0 0.0
        %314 = vmatpush.xpose.msra.mxu0 0.0
        %315 = vmatpush.xpose.msra.mxu0 0.0
        %316 = vmatpush.xpose.msra.mxu0 0.0
        %317 = vmatpush.xpose.msra.mxu0 0.0
        %318 = vmatpush.xpose.msra.mxu0 0.0
        %319 = vmatpush.xpose.msra.mxu0 0.0
        %320 = vmatpush.xpose.msra.mxu0 0.0
        %321 = vmatpush.xpose.msra.mxu0 0.0
        %322 = vmatpush.xpose.msra.mxu0 0.0
        %323 = vmatpush.xpose.msra.mxu0 0.0
        %324 = vmatpush.xpose.msra.mxu0 0.0
        %325 = vmatpush.xpose.msra.mxu0 %v308
        %326 = vmatmul.f32.gmra.mxu0 %v305
        %v327 = vpop.f32.mrf.mxu0
        %v328 = vadd.f32 0.0, %v327
        %329 = vdwg.mxu0
        %v330 = vmul.f32 %v328, 0.35355338
        %v331 = vld [vmem:[#allocation2] sm:$0xff]
        %v332 = vsel %vm303, %v330, -inf
        %333 = vmax.xlane.f32.xlu0 %v332
        %v334 = vpop.xlane.xlu0 %333
        %v335 = vmax.f32 %v331, %v334
        %v336 = vsub.f32 %v331, %v335
        %v337 = vmul.f32 %v336, 1.442695
        %v338 = vpow.pop %v337
        %340 = vset.pattern.permute.xlu0 0
        %341 = vperm.xlu0 %340, %v335
        %v342 = vpop.permute.xlu0 %341
        %v344 = vsub.f32 %v330, %v342
        %v345 = vmul.f32 %v344, 1.442695
        %v346 = vpow.pop %v345
        %v347 = vld [vmem:[#allocation3] sm:$0xff]
        %v348 = vmul.f32 %v338, %v347
        %v349 = vsel %vm303, %v346, 0.0
        %350 = vadd.xlane.f32.xlu0 %v349
        %v351 = vpop.xlane.xlu0 %350
        %v352 = vadd.f32 %v348, %v351
        %vm353 = vcmask 7168
        %354 = vst.msk [vmem:[#allocation3] sm:$0xff] %vm353, %v352
        %v355 = vld [vmem:[#allocation4] sm:$0xff]
        %357 = vset.pattern.permute.xlu0 0
        %358 = vperm.xlu0 %357, %v338
        %v359 = vpop.permute.xlu0 %358
        %v361 = vmul.f32 %v359, %v355
        %v362 = vld [vmem:[%s278] sm:$0xff]
        %v364 = vsel %vm303, %v346, 0
        %366 = vmatpush.msra.mxu0 0.0
        %367 = vmatpush.msra.mxu0 0.0
        %368 = vmatpush.msra.mxu0 0.0
        %369 = vmatpush.msra.mxu0 0.0
        %370 = vmatpush.msra.mxu0 0.0
        %371 = vmatpush.msra.mxu0 0.0
        %372 = vmatpush.msra.mxu0 0.0
        %373 = vmatpush.msra.mxu0 0.0
        %374 = vmatpush.msra.mxu0 0.0
        %375 = vmatpush.msra.mxu0 0.0
        %376 = vmatpush.msra.mxu0 0.0
        %377 = vmatpush.msra.mxu0 0.0
        %378 = vmatpush.msra.mxu0 0.0
        %379 = vmatpush.msra.mxu0 0.0
        %380 = vmatpush.msra.mxu0 0.0
        %381 = vmatpush.msra.mxu0 %v362
        %382 = vmatmul.f32.gmra.mxu0 %v364
        %v383 = vpop.f32.mrf.mxu0
        %v384 = vadd.f32 0.0, %v383
        %385 = vdwg.mxu0
        %v386 = vadd.f32 %v361, %v384
        %387 = vst.msk [vmem:[#allocation4] sm:$0xff] %vm303, %v386
        %388 = vst.msk [vmem:[#allocation2] sm:$0xff] %vm353, %v335
      $region40: #{causal_self_attention.4} parent=31 // pred_fallthru
        _
      %p389 = scmp.eq.s32.totalorder %s21, %s20
      // Predicated region
      $region41: #{causal_self_attention.4} parent=31 // pred_check
        %p390 = pneg %p389
      $region42: #{causal_self_attention.4} parent=31 // pred_check_branch
        %392 = sbr.rel (%p390) target = $region44
      $region43: #{causal_self_attention.4} parent=31 // pred_region
        %v393 = vld [vmem:[%s258] sm:$0xff]
        %v394 = vld [vmem:[%s267] sm:$0xff]
        %vm395 = vcmask 64512
        %v397 = vsel %vm395, %v393, 0
        %v400 = vsel %vm395, %v394, 0
        %402 = vmatpush.xpose.msra.mxu0 0.0
        %403 = vmatpush.xpose.msra.mxu0 0.0
        %404 = vmatpush.xpose.msra.mxu0 0.0
        %405 = vmatpush.xpose.msra.mxu0 0.0
        %406 = vmatpush.xpose.msra.mxu0 0.0
        %407 = vmatpush.xpose.msra.mxu0 0.0
        %408 = vmatpush.xpose.msra.mxu0 0.0
        %409 = vmatpush.xpose.msra.mxu0 0.0
        %410 = vmatpush.xpose.msra.mxu0 0.0
        %411 = vmatpush.xpose.msra.mxu0 0.0
        %412 = vmatpush.xpose.msra.mxu0 0.0
        %413 = vmatpush.xpose.msra.mxu0 0.0
        %414 = vmatpush.xpose.msra.mxu0 0.0
        %415 = vmatpush.xpose.msra.mxu0 0.0
        %416 = vmatpush.xpose.msra.mxu0 0.0
        %417 = vmatpush.xpose.msra.mxu0 %v400
        %418 = vmatmul.f32.gmra.mxu0 %v397
        %v419 = vpop.f32.mrf.mxu0
        %v420 = vadd.f32 0.0, %v419
        %421 = vdwg.mxu0
        %v422 = vmul.f32 %v420, 0.35355338
        %s423 = smul.u32 %s20, 8
        %s424 = smul.u32 %s21, 8
        %v425 = vlaneseq
        %v426 = vshrl.u32 %v425, 7
        %v427 = vstv %s423
        %v428 = vadd.s32 %v427, %v426
        %v429 = vlaneseq
        %v430 = vand.u32 %v429, 127
        %v431 = vstv %s424
        %v432 = vadd.s32 %v431, %v430
        %vm433 = vcmp.ge.s32.totalorder %v428, %v432
        %v434 = vsel %vm433, %v422, -inf
        %v435 = vld [vmem:[#allocation2] sm:$0xff]
        %v436 = vsel %vm395, %v434, -inf
        %437 = vmax.xlane.f32.xlu0 %v436
        %v438 = vpop.xlane.xlu0 %437
        %v439 = vmax.f32 %v435, %v438
        %v440 = vsub.f32 %v435, %v439
        %v441 = vmul.f32 %v440, 1.442695
        %v442 = vpow.pop %v441
        %444 = vset.pattern.permute.xlu0 0
        %445 = vperm.xlu0 %444, %v439
        %v446 = vpop.permute.xlu0 %445
        %v448 = vsub.f32 %v434, %v446
        %v449 = vmul.f32 %v448, 1.442695
        %v450 = vpow.pop %v449
        %v451 = vld [vmem:[#allocation3] sm:$0xff]
        %v452 = vmul.f32 %v442, %v451
        %v453 = vsel %vm395, %v450, 0.0
        %454 = vadd.xlane.f32.xlu0 %v453
        %v455 = vpop.xlane.xlu0 %454
        %v456 = vadd.f32 %v452, %v455
        %vm457 = vcmask 7168
        %458 = vst.msk [vmem:[#allocation3] sm:$0xff] %vm457, %v456
        %v459 = vld [vmem:[#allocation4] sm:$0xff]
        %461 = vset.pattern.permute.xlu0 0
        %462 = vperm.xlu0 %461, %v442
        %v463 = vpop.permute.xlu0 %462
        %v465 = vmul.f32 %v463, %v459
        %v466 = vld [vmem:[%s278] sm:$0xff]
        %v468 = vsel %vm395, %v450, 0
        %470 = vmatpush.msra.mxu0 0.0
        %471 = vmatpush.msra.mxu0 0.0
        %472 = vmatpush.msra.mxu0 0.0
        %473 = vmatpush.msra.mxu0 0.0
        %474 = vmatpush.msra.mxu0 0.0
        %475 = vmatpush.msra.mxu0 0.0
        %476 = vmatpush.msra.mxu0 0.0
        %477 = vmatpush.msra.mxu0 0.0
        %478 = vmatpush.msra.mxu0 0.0
        %479 = vmatpush.msra.mxu0 0.0
        %480 = vmatpush.msra.mxu0 0.0
        %481 = vmatpush.msra.mxu0 0.0
        %482 = vmatpush.msra.mxu0 0.0
        %483 = vmatpush.msra.mxu0 0.0
        %484 = vmatpush.msra.mxu0 0.0
        %485 = vmatpush.msra.mxu0 %v466
        %486 = vmatmul.f32.gmra.mxu0 %v468
        %v487 = vpop.f32.mrf.mxu0
        %v488 = vadd.f32 0.0, %v487
        %489 = vdwg.mxu0
        %v490 = vadd.f32 %v465, %v488
        %491 = vst.msk [vmem:[#allocation4] sm:$0xff] %vm395, %v490
        %492 = vst.msk [vmem:[#allocation2] sm:$0xff] %vm457, %v439
      $region44: #{causal_self_attention.4} parent=31 // pred_fallthru
        _
      // Predicated region
      $region45: #{causal_self_attention.4} parent=31 // pred_check
        %p493 = pneg %p288
      $region46: #{causal_self_attention.4} parent=31 // pred_check_branch
        %495 = sbr.rel (%p493) target = $region48
      $region47: #{causal_self_attention.4} parent=31 // pred_region
        %v496 = vld [vmem:[#allocation4] sm:$0xff]
        %v497 = vld [vmem:[#allocation3] sm:$0xff]
        %v498 = vrcp.pop %v497
        %500 = vset.pattern.permute.xlu0 0
        %501 = vperm.xlu0 %500, %v498
        %v502 = vpop.permute.xlu0 %501
        %v504 = vmul.f32 %v496, %v502
        %vm505 = vcmask 64512
        %506 = vst.msk [vmem:[%s287] sm:$0xff] %vm505, %v504
      $region48: #{causal_self_attention.4} parent=31 // pred_fallthru
        _
      %p507 = scmp.lt.s32.totalorder %s19, 7
      %s508 = scalar_select %p507, %s19, 7
      %p509 = scmp.lt.s32.totalorder %s20, 0
      %s510 = scalar_select %p509, %s20, 0
      %s511 = sadd.s32 %s510, %s508
      %s512 = smul.addr %s511, 8
      %s513 = scalar_lea.vmem %s3, %s512
      // Predicated region
      $region49: #{causal_self_attention.4} parent=31 // pred_check
        %p514 = pneg %p145
      $region50: #{causal_self_attention.4} parent=31 // pred_check_branch
        %516 = sbr.rel (%p514) target = $region52
      $region51: #{causal_self_attention.4} parent=31 // pred_region
        _
      $region52: #{causal_self_attention.4} parent=31 // pred_fallthru
        _
    $region32: #{causal_self_attention.4} parent=5 // pred_fallthru
      _
    %p517 = scmp.le.s32.totalorder 2, %s9
    // Predicated region
    $region53: #{causal_self_attention.4} parent=5 // pred_check
      %p518 = pneg %p517
    $region54: #{causal_self_attention.4} parent=5 // pred_check_branch
      %520 = sbr.rel (%p518) target = $region56
    $region55: #{causal_self_attention.4} parent=5 // pred_region
      %s521 = ssub.s32 %s9, 2
      // Predicated region
      $region57: #{causal_self_attention.4} parent=55 // pred_check
        %p522 = pneg %p151
      $region58: #{causal_self_attention.4} parent=55 // pred_check_branch
        %524 = sbr.rel (%p522) target = $region60
      $region59: #{causal_self_attention.4} parent=55 // pred_region
        %p525 = scmp.lt.s32.totalorder %s22, 7
        %s526 = scalar_select %p525, %s22, 7
        %p527 = scmp.lt.s32.totalorder %s23, 0
        %s528 = scalar_select %p527, %s23, 0
        %s529 = sadd.s32 %s528, %s526
        %s530 = smul.addr %s529, 8
        %s531 = scalar_lea.vmem %s3, %s530
      $region60: #{causal_self_attention.4} parent=55 // pred_fallthru
        _
    $region56: #{causal_self_attention.4} parent=5 // pred_fallthru
      _
  $region6: #{causal_self_attention.4} parent=0 // loop_footer
    %s13 = sadd.s32 1, %s9
  $region7: #{causal_self_attention.4} parent=0 // loop_footer_branch
    %8 = sbr.rel target = $region3
  $region8: #{causal_self_attention.4} parent=0 // loop_exit
    _

</llo_original>
